<compile_context>
chip_gen: v5e
topology: v5e:2x2
jax: 0.10.0
libtpu: 0.0.40
codegen_flags: <defaults>
</compile_context>

<pallas_src>
import functools

import jax
import jax.numpy as jnp
import numpy as np
from jax.experimental import pallas as pl
from jax.experimental.pallas import tpu as pltpu

EPS = 1e-5


def _residual_block_kernel(xp_ref, w1_ref, g1_ref, b1_ref, w2_ref, g2_ref, b2_ref,
                           out_ref, hpad_ref, *, chans):
    # xp_ref  : (N, H+2, W*C)  input, lane-dense last dim, zero-padded in H only
    # w*_ref  : (3*W*C, W*C)   banded conv weights (3x3 taps + W-padding folded in)
    # g*/b*   : (1, W*C)       BN gamma/beta pre-tiled over W
    # out_ref : (N*H, W*C)     lane-dense output
    # hpad_ref: (N, H+2, W*C)  scratch: H-padded intermediate for conv2
    N, HP, WC = xp_ref.shape
    H = HP - 2
    NH = N * H
    W = WC // chans
    inv_m = 1.0 / float(NH * W)          # 1 / (N*H*W) samples per channel

    # Channel selector: S[i, j] = 1 iff lanes i, j hold the same channel.
    # colsum @ S == per-channel sum broadcast back across the W lane-groups.
    li = jax.lax.broadcasted_iota(jnp.int32, (WC, WC), 0)
    lj = jax.lax.broadcasted_iota(jnp.int32, (WC, WC), 1)
    S = (li % chans == lj % chans).astype(jnp.float32)

    def conv(src_ref, w_ref):
        # Three H-shifted row slabs, concatenated on lanes -> one MXU matmul.
        rows = [src_ref[:, ky:ky + H, :].reshape(NH, WC) for ky in range(3)]
        xcat = jnp.concatenate(rows, axis=-1)                     # (NH, 3*WC)
        return jnp.dot(xcat, w_ref[...], preferred_element_type=jnp.float32)

    def batchnorm(acc, g_ref, b_ref):
        # One-pass stats: per-channel E[x], E[x^2] broadcast to (1, WC).
        mean = jnp.sum(jnp.dot(acc, S, preferred_element_type=jnp.float32),
                       axis=0, keepdims=True) * inv_m
        ex2 = jnp.sum(jnp.dot(acc * acc, S, preferred_element_type=jnp.float32),
                      axis=0, keepdims=True) * inv_m
        var = ex2 - mean * mean
        return (acc - mean) * jax.lax.rsqrt(var + EPS) * g_ref[...] + b_ref[...]

    # ---- conv1 -> bn1 -> relu ----
    h = jnp.maximum(batchnorm(conv(xp_ref, w1_ref), g1_ref, b1_ref), 0.0)

    # ---- re-pad intermediate in H only: zero just the two border rows/image ----
    hpad_ref[:, 0:1, :] = jnp.zeros((N, 1, WC), jnp.float32)
    hpad_ref[:, H + 1:H + 2, :] = jnp.zeros((N, 1, WC), jnp.float32)
    hpad_ref[:, 1:H + 1, :] = h.reshape(N, H, WC)

    # ---- conv2 -> bn2 -> +residual -> relu ----
    h2 = batchnorm(conv(hpad_ref, w2_ref), g2_ref, b2_ref)
    residual = xp_ref[:, 1:H + 1, :].reshape(NH, WC)
    out_ref[...] = jnp.maximum(h2 + residual, 0.0)


def _banded_weight(w_oihw, W):
    """OIHW 3x3 conv weight -> (3*W*Cin, W*Cout) banded matrix.

    Row index  = ky*W*Cin + xi*Cin + ci   (input row-offset ky, column xi, chan ci)
    Col index  = xo*Cout + co             (output column xo, chan co)
    Non-zero iff xi == xo + kx - 1 for some kx in {0,1,2}; out-of-range columns
    are simply absent, which implements the W-direction zero padding.
    """
    w_hwio = jnp.transpose(w_oihw, (2, 3, 1, 0)).astype(jnp.float32)  # (3,3,Cin,Cout)
    kh, kw, cin, cout = w_hwio.shape
    sel = np.zeros((kw, W, W), np.float32)
    for kx in range(kw):
        for xo in range(W):
            xi = xo + kx - 1
            if 0 <= xi < W:
                sel[kx, xi, xo] = 1.0
    wb = jnp.einsum('aio,kacd->kicod', sel, w_hwio)       # (3, W, Cin, W, Cout)
    return wb.reshape(kh * W * cin, W * cout)


@jax.jit
def residual_block_forward(x_nchw, w1_oihw, g1, b1, w2_oihw, g2, b2):
    N, C, H, W = x_nchw.shape
    WC = W * C

    # NCHW -> NHWC -> (N, H, W*C) lane-dense; pad H by 1. XLA fuses these passes.
    x_lane = jnp.transpose(x_nchw, (0, 2, 3, 1)).astype(jnp.float32).reshape(N, H, WC)
    x_pad = jnp.pad(x_lane, ((0, 0), (1, 1), (0, 0)))

    w1b = _banded_weight(w1_oihw, W)
    w2b = _banded_weight(w2_oihw, W)
    # gamma/beta pre-tiled to the (1, W*C) lane layout (index = x*C + c -> g[c]).
    g1t = jnp.tile(g1.astype(jnp.float32), W).reshape(1, WC)
    b1t = jnp.tile(b1.astype(jnp.float32), W).reshape(1, WC)
    g2t = jnp.tile(g2.astype(jnp.float32), W).reshape(1, WC)
    b2t = jnp.tile(b2.astype(jnp.float32), W).reshape(1, WC)

    vmem = pl.BlockSpec(memory_space=pltpu.MemorySpace.VMEM)
    out_lane = pl.pallas_call(
        functools.partial(_residual_block_kernel, chans=C),
        out_shape=jax.ShapeDtypeStruct((N * H, WC), jnp.float32),
        in_specs=[vmem] * 7,
        out_specs=vmem,
        scratch_shapes=[pltpu.VMEM((N, H + 2, WC), jnp.float32)],
    )(x_pad, w1b, g1t, b1t, w2b, g2t, b2t)

    out_nhwc = out_lane.reshape(N, H, W, C)
    return jnp.transpose(out_nhwc, (0, 3, 1, 2))   # back to NCHW


def _ref_forward(x, w1, g1, b1, w2, g2, b2):
    """Pure-JAX reference (NCHW), mirrors the PyTorch forward in training mode."""
    def conv(x, w):
        return jax.lax.conv_general_dilated(
            x, w, window_strides=(1, 1), padding=((1, 1), (1, 1)),
            dimension_numbers=('NCHW', 'OIHW', 'NCHW'))

    def bn(x, g, b):
        mean = jnp.mean(x, axis=(0, 2, 3), keepdims=True)
        var = jnp.mean((x - mean) ** 2, axis=(0, 2, 3), keepdims=True)
        return ((x - mean) * jax.lax.rsqrt(var + EPS)
                * g.reshape(1, -1, 1, 1) + b.reshape(1, -1, 1, 1))

    out = jax.nn.relu(bn(conv(x, w1), g1, b1))
    out = bn(conv(out, w2), g2, b2)
    return jax.nn.relu(out + x)


if __name__ == "__main__":
    key = jax.random.PRNGKey(0)
    N, C, H, W = 2, 8, 16, 16          # in_channels == out_channels (downsample=None); W*C = 128
    k1, k2, k3 = jax.random.split(key, 3)

    x = jax.random.normal(k1, (N, C, H, W), jnp.float32)
    bound = 1.0 / np.sqrt(C * 9)
    w1 = jax.random.uniform(k2, (C, C, 3, 3), jnp.float32, -bound, bound)  # OIHW
    w2 = jax.random.uniform(k3, (C, C, 3, 3), jnp.float32, -bound, bound)  # OIHW
    g1 = jnp.ones((C,), jnp.float32); b1 = jnp.zeros((C,), jnp.float32)
    g2 = jnp.ones((C,), jnp.float32); b2 = jnp.zeros((C,), jnp.float32)

    out = jax.block_until_ready(residual_block_forward(x, w1, g1, b1, w2, g2, b2))
    ref = jax.block_until_ready(_ref_forward(x, w1, g1, b1, w2, g2, b2))
    np.testing.assert_allclose(np.asarray(out), np.asarray(ref), rtol=2e-2, atol=2e-2)
    print("KERNEL_OK")
</pallas_src>

<mosaic_0001>
module attributes {stable_mosaic.version = 11 : i64} {
  func.func @_residual_block_kernel(%arg0: memref<2x18x128xf32, #tpu.memory_space<vmem>>, %arg1: memref<384x128xf32, #tpu.memory_space<vmem>>, %arg2: memref<1x128xf32, #tpu.memory_space<vmem>>, %arg3: memref<1x128xf32, #tpu.memory_space<vmem>>, %arg4: memref<384x128xf32, #tpu.memory_space<vmem>>, %arg5: memref<1x128xf32, #tpu.memory_space<vmem>>, %arg6: memref<1x128xf32, #tpu.memory_space<vmem>>, %arg7: memref<32x128xf32, #tpu.memory_space<vmem>>, %arg8: memref<2x18x128xf32, #tpu.memory_space<vmem>>) attributes {dimension_semantics = [], scalar_prefetch = 0 : i64, scratch_operands = 1 : i64, tpu.core_type = #tpu.core_type<tc>} {
    %0 = tpu.iota {dimensions = array<i32: 0>} : vector<128x128xi32>
    %1 = tpu.iota {dimensions = array<i32: 1>} : vector<128x128xi32>
    %c8_i32 = arith.constant 8 : i32
    %c0_i32 = arith.constant 0 : i32
    %2 = arith.cmpi eq, %c8_i32, %c0_i32 : i32
    %c1_i32 = arith.constant 1 : i32
    %3 = arith.select %2, %c1_i32, %c8_i32 : i32
    %4 = vector.broadcast %3 : i32 to vector<128x128xi32>
    %5 = arith.remsi %0, %4 : vector<128x128xi32>
    %c0_i32_0 = arith.constant 0 : i32
    %6 = vector.broadcast %c0_i32_0 : i32 to vector<128x128xi32>
    %7 = arith.cmpi ne, %5, %6 : vector<128x128xi32>
    %c0_i32_1 = arith.constant 0 : i32
    %8 = vector.broadcast %c0_i32_1 : i32 to vector<128x128xi32>
    %9 = arith.cmpi slt, %5, %8 : vector<128x128xi32>
    %c0_i32_2 = arith.constant 0 : i32
    %10 = arith.cmpi slt, %3, %c0_i32_2 : i32
    %11 = vector.broadcast %10 : i1 to vector<128x128xi1>
    %12 = vector.broadcast %11 : vector<128x128xi1> to vector<128x128xi1>
    %13 = arith.xori %9, %12 : vector<128x128xi1>
    %14 = arith.andi %13, %7 : vector<128x128xi1>
    %15 = vector.broadcast %3 : i32 to vector<128x128xi32>
    %16 = arith.addi %5, %15 : vector<128x128xi32>
    %17 = arith.select %14, %16, %5 : vector<128x128xi1>, vector<128x128xi32>
    %c8_i32_3 = arith.constant 8 : i32
    %c0_i32_4 = arith.constant 0 : i32
    %18 = arith.cmpi eq, %c8_i32_3, %c0_i32_4 : i32
    %c1_i32_5 = arith.constant 1 : i32
    %19 = arith.select %18, %c1_i32_5, %c8_i32_3 : i32
    %20 = vector.broadcast %19 : i32 to vector<128x128xi32>
    %21 = arith.remsi %1, %20 : vector<128x128xi32>
    %c0_i32_6 = arith.constant 0 : i32
    %22 = vector.broadcast %c0_i32_6 : i32 to vector<128x128xi32>
    %23 = arith.cmpi ne, %21, %22 : vector<128x128xi32>
    %c0_i32_7 = arith.constant 0 : i32
    %24 = vector.broadcast %c0_i32_7 : i32 to vector<128x128xi32>
    %25 = arith.cmpi slt, %21, %24 : vector<128x128xi32>
    %c0_i32_8 = arith.constant 0 : i32
    %26 = arith.cmpi slt, %19, %c0_i32_8 : i32
    %27 = vector.broadcast %26 : i1 to vector<128x128xi1>
    %28 = vector.broadcast %27 : vector<128x128xi1> to vector<128x128xi1>
    %29 = arith.xori %25, %28 : vector<128x128xi1>
    %30 = arith.andi %29, %23 : vector<128x128xi1>
    %31 = vector.broadcast %19 : i32 to vector<128x128xi32>
    %32 = arith.addi %21, %31 : vector<128x128xi32>
    %33 = arith.select %30, %32, %21 : vector<128x128xi1>, vector<128x128xi32>
    %34 = arith.cmpi eq, %17, %33 : vector<128x128xi32>
    %35 = arith.extui %34 : vector<128x128xi1> to vector<128x128xi32>
    %36 = arith.sitofp %35 : vector<128x128xi32> to vector<128x128xf32>
    %c0 = arith.constant 0 : index
    %c0_9 = arith.constant 0 : index
    %c0_10 = arith.constant 0 : index
    %37 = vector.load %arg0[%c0, %c0_9, %c0_10] : memref<2x18x128xf32, #tpu.memory_space<vmem>>, vector<2x16x128xf32>
    %38 = vector.shape_cast %37 : vector<2x16x128xf32> to vector<32x128xf32>
    %c0_11 = arith.constant 0 : index
    %c1 = arith.constant 1 : index
    %c0_12 = arith.constant 0 : index
    %39 = vector.load %arg0[%c0_11, %c1, %c0_12] : memref<2x18x128xf32, #tpu.memory_space<vmem>>, vector<2x16x128xf32>
    %40 = vector.shape_cast %39 : vector<2x16x128xf32> to vector<32x128xf32>
    %c0_13 = arith.constant 0 : index
    %c2 = arith.constant 2 : index
    %c0_14 = arith.constant 0 : index
    %41 = vector.load %arg0[%c0_13, %c2, %c0_14] : memref<2x18x128xf32, #tpu.memory_space<vmem>>, vector<2x16x128xf32>
    %42 = vector.shape_cast %41 : vector<2x16x128xf32> to vector<32x128xf32>
    %43 = tpu.concatenate %38, %40, %42 in 1 : vector<32x128xf32>, vector<32x128xf32>, vector<32x128xf32> -> vector<32x384xf32>
    %c0_15 = arith.constant 0 : index
    %c0_16 = arith.constant 0 : index
    %44 = vector.load %arg1[%c0_15, %c0_16] : memref<384x128xf32, #tpu.memory_space<vmem>>, vector<384x128xf32>
    %cst = arith.constant dense<0.000000e+00> : vector<32x128xf32>
    %45 = tpu.matmul %43, %44, %cst {dimension_numbers = #tpu.dot_dimension_numbers<[1], [0], [0], [1], [0, 0, 1, 1], [], []>} : vector<32x384xf32>, vector<384x128xf32>, vector<32x128xf32> -> vector<32x128xf32>
    %cst_17 = arith.constant dense<0.000000e+00> : vector<32x128xf32>
    %46 = tpu.matmul %45, %36, %cst_17 {dimension_numbers = #tpu.dot_dimension_numbers<[1], [0], [0], [1], [0, 0, 1, 1], [], []>} : vector<32x128xf32>, vector<128x128xf32>, vector<32x128xf32> -> vector<32x128xf32>
    %cst_18 = arith.constant dense<0.000000e+00> : vector<128xf32>
    %47 = vector.multi_reduction <add>, %46, %cst_18 [0] : vector<32x128xf32> to vector<128xf32>
    %48 = vector.shape_cast %47 : vector<128xf32> to vector<1x128xf32>
    %cst_19 = arith.constant 0.001953125 : f32
    %49 = vector.broadcast %cst_19 : f32 to vector<1x128xf32>
    %50 = arith.mulf %48, %49 : vector<1x128xf32>
    %51 = arith.mulf %45, %45 : vector<32x128xf32>
    %cst_20 = arith.constant dense<0.000000e+00> : vector<32x128xf32>
    %52 = tpu.matmul %51, %36, %cst_20 {dimension_numbers = #tpu.dot_dimension_numbers<[1], [0], [0], [1], [0, 0, 1, 1], [], []>} : vector<32x128xf32>, vector<128x128xf32>, vector<32x128xf32> -> vector<32x128xf32>
    %cst_21 = arith.constant dense<0.000000e+00> : vector<128xf32>
    %53 = vector.multi_reduction <add>, %52, %cst_21 [0] : vector<32x128xf32> to vector<128xf32>
    %54 = vector.shape_cast %53 : vector<128xf32> to vector<1x128xf32>
    %cst_22 = arith.constant 0.001953125 : f32
    %55 = vector.broadcast %cst_22 : f32 to vector<1x128xf32>
    %56 = arith.mulf %54, %55 : vector<1x128xf32>
    %57 = arith.mulf %50, %50 : vector<1x128xf32>
    %58 = arith.subf %56, %57 : vector<1x128xf32>
    %59 = vector.broadcast %50 : vector<1x128xf32> to vector<32x128xf32>
    %60 = arith.subf %45, %59 : vector<32x128xf32>
    %cst_23 = arith.constant 9.99999974E-6 : f32
    %61 = vector.broadcast %cst_23 : f32 to vector<1x128xf32>
    %62 = arith.addf %58, %61 : vector<1x128xf32>
    %63 = math.rsqrt %62 : vector<1x128xf32>
    %64 = vector.broadcast %63 : vector<1x128xf32> to vector<32x128xf32>
    %65 = arith.mulf %60, %64 : vector<32x128xf32>
    %c0_24 = arith.constant 0 : index
    %c0_25 = arith.constant 0 : index
    %66 = vector.load %arg2[%c0_24, %c0_25] : memref<1x128xf32, #tpu.memory_space<vmem>>, vector<1x128xf32>
    %67 = vector.broadcast %66 : vector<1x128xf32> to vector<32x128xf32>
    %68 = arith.mulf %65, %67 : vector<32x128xf32>
    %c0_26 = arith.constant 0 : index
    %c0_27 = arith.constant 0 : index
    %69 = vector.load %arg3[%c0_26, %c0_27] : memref<1x128xf32, #tpu.memory_space<vmem>>, vector<1x128xf32>
    %70 = vector.broadcast %69 : vector<1x128xf32> to vector<32x128xf32>
    %71 = arith.addf %68, %70 : vector<32x128xf32>
    %cst_28 = arith.constant 0.000000e+00 : f32
    %72 = vector.broadcast %cst_28 : f32 to vector<32x128xf32>
    %73 = arith.maximumf %71, %72 : vector<32x128xf32>
    %cst_29 = arith.constant 0.000000e+00 : f32
    %74 = vector.broadcast %cst_29 : f32 to vector<2x1x128xf32>
    %c0_30 = arith.constant 0 : index
    %c0_31 = arith.constant 0 : index
    %c0_32 = arith.constant 0 : index
    %75 = vector.load %arg8[%c0_30, %c0_31, %c0_32] : memref<2x18x128xf32, #tpu.memory_space<vmem>>, vector<2x1x128xf32>
    tpu.vector_store %arg8[%c0_30, %c0_31, %c0_32], %74 {strides = array<i32>} : memref<2x18x128xf32, #tpu.memory_space<vmem>>, vector<2x1x128xf32>,
    %cst_33 = arith.constant 0.000000e+00 : f32
    %76 = vector.broadcast %cst_33 : f32 to vector<2x1x128xf32>
    %c0_34 = arith.constant 0 : index
    %c17 = arith.constant 17 : index
    %c0_35 = arith.constant 0 : index
    %77 = vector.load %arg8[%c0_34, %c17, %c0_35] : memref<2x18x128xf32, #tpu.memory_space<vmem>>, vector<2x1x128xf32>
    tpu.vector_store %arg8[%c0_34, %c17, %c0_35], %76 {strides = array<i32>} : memref<2x18x128xf32, #tpu.memory_space<vmem>>, vector<2x1x128xf32>,
    %78 = vector.shape_cast %73 : vector<32x128xf32> to vector<2x16x128xf32>
    %c0_36 = arith.constant 0 : index
    %c1_37 = arith.constant 1 : index
    %c0_38 = arith.constant 0 : index
    %79 = vector.load %arg8[%c0_36, %c1_37, %c0_38] : memref<2x18x128xf32, #tpu.memory_space<vmem>>, vector<2x16x128xf32>
    tpu.vector_store %arg8[%c0_36, %c1_37, %c0_38], %78 {strides = array<i32>} : memref<2x18x128xf32, #tpu.memory_space<vmem>>, vector<2x16x128xf32>,
    %c0_39 = arith.constant 0 : index
    %c0_40 = arith.constant 0 : index
    %c0_41 = arith.constant 0 : index
    %80 = vector.load %arg8[%c0_39, %c0_40, %c0_41] : memref<2x18x128xf32, #tpu.memory_space<vmem>>, vector<2x16x128xf32>
    %81 = vector.shape_cast %80 : vector<2x16x128xf32> to vector<32x128xf32>
    %c0_42 = arith.constant 0 : index
    %c1_43 = arith.constant 1 : index
    %c0_44 = arith.constant 0 : index
    %82 = vector.load %arg8[%c0_42, %c1_43, %c0_44] : memref<2x18x128xf32, #tpu.memory_space<vmem>>, vector<2x16x128xf32>
    %83 = vector.shape_cast %82 : vector<2x16x128xf32> to vector<32x128xf32>
    %c0_45 = arith.constant 0 : index
    %c2_46 = arith.constant 2 : index
    %c0_47 = arith.constant 0 : index
    %84 = vector.load %arg8[%c0_45, %c2_46, %c0_47] : memref<2x18x128xf32, #tpu.memory_space<vmem>>, vector<2x16x128xf32>
    %85 = vector.shape_cast %84 : vector<2x16x128xf32> to vector<32x128xf32>
    %86 = tpu.concatenate %81, %83, %85 in 1 : vector<32x128xf32>, vector<32x128xf32>, vector<32x128xf32> -> vector<32x384xf32>
    %c0_48 = arith.constant 0 : index
    %c0_49 = arith.constant 0 : index
    %87 = vector.load %arg4[%c0_48, %c0_49] : memref<384x128xf32, #tpu.memory_space<vmem>>, vector<384x128xf32>
    %cst_50 = arith.constant dense<0.000000e+00> : vector<32x128xf32>
    %88 = tpu.matmul %86, %87, %cst_50 {dimension_numbers = #tpu.dot_dimension_numbers<[1], [0], [0], [1], [0, 0, 1, 1], [], []>} : vector<32x384xf32>, vector<384x128xf32>, vector<32x128xf32> -> vector<32x128xf32>
    %cst_51 = arith.constant dense<0.000000e+00> : vector<32x128xf32>
    %89 = tpu.matmul %88, %36, %cst_51 {dimension_numbers = #tpu.dot_dimension_numbers<[1], [0], [0], [1], [0, 0, 1, 1], [], []>} : vector<32x128xf32>, vector<128x128xf32>, vector<32x128xf32> -> vector<32x128xf32>
    %cst_52 = arith.constant dense<0.000000e+00> : vector<128xf32>
    %90 = vector.multi_reduction <add>, %89, %cst_52 [0] : vector<32x128xf32> to vector<128xf32>
    %91 = vector.shape_cast %90 : vector<128xf32> to vector<1x128xf32>
    %cst_53 = arith.constant 0.001953125 : f32
    %92 = vector.broadcast %cst_53 : f32 to vector<1x128xf32>
    %93 = arith.mulf %91, %92 : vector<1x128xf32>
    %94 = arith.mulf %88, %88 : vector<32x128xf32>
    %cst_54 = arith.constant dense<0.000000e+00> : vector<32x128xf32>
    %95 = tpu.matmul %94, %36, %cst_54 {dimension_numbers = #tpu.dot_dimension_numbers<[1], [0], [0], [1], [0, 0, 1, 1], [], []>} : vector<32x128xf32>, vector<128x128xf32>, vector<32x128xf32> -> vector<32x128xf32>
    %cst_55 = arith.constant dense<0.000000e+00> : vector<128xf32>
    %96 = vector.multi_reduction <add>, %95, %cst_55 [0] : vector<32x128xf32> to vector<128xf32>
    %97 = vector.shape_cast %96 : vector<128xf32> to vector<1x128xf32>
    %cst_56 = arith.constant 0.001953125 : f32
    %98 = vector.broadcast %cst_56 : f32 to vector<1x128xf32>
    %99 = arith.mulf %97, %98 : vector<1x128xf32>
    %100 = arith.mulf %93, %93 : vector<1x128xf32>
    %101 = arith.subf %99, %100 : vector<1x128xf32>
    %102 = vector.broadcast %93 : vector<1x128xf32> to vector<32x128xf32>
    %103 = arith.subf %88, %102 : vector<32x128xf32>
    %cst_57 = arith.constant 9.99999974E-6 : f32
    %104 = vector.broadcast %cst_57 : f32 to vector<1x128xf32>
    %105 = arith.addf %101, %104 : vector<1x128xf32>
    %106 = math.rsqrt %105 : vector<1x128xf32>
    %107 = vector.broadcast %106 : vector<1x128xf32> to vector<32x128xf32>
    %108 = arith.mulf %103, %107 : vector<32x128xf32>
    %c0_58 = arith.constant 0 : index
    %c0_59 = arith.constant 0 : index
    %109 = vector.load %arg5[%c0_58, %c0_59] : memref<1x128xf32, #tpu.memory_space<vmem>>, vector<1x128xf32>
    %110 = vector.broadcast %109 : vector<1x128xf32> to vector<32x128xf32>
    %111 = arith.mulf %108, %110 : vector<32x128xf32>
    %c0_60 = arith.constant 0 : index
    %c0_61 = arith.constant 0 : index
    %112 = vector.load %arg6[%c0_60, %c0_61] : memref<1x128xf32, #tpu.memory_space<vmem>>, vector<1x128xf32>
    %113 = vector.broadcast %112 : vector<1x128xf32> to vector<32x128xf32>
    %114 = arith.addf %111, %113 : vector<32x128xf32>
    %c0_62 = arith.constant 0 : index
    %c1_63 = arith.constant 1 : index
    %c0_64 = arith.constant 0 : index
    %115 = vector.load %arg0[%c0_62, %c1_63, %c0_64] : memref<2x18x128xf32, #tpu.memory_space<vmem>>, vector<2x16x128xf32>
    %116 = vector.shape_cast %115 : vector<2x16x128xf32> to vector<32x128xf32>
    %117 = arith.addf %114, %116 : vector<32x128xf32>
    %cst_65 = arith.constant 0.000000e+00 : f32
    %118 = vector.broadcast %cst_65 : f32 to vector<32x128xf32>
    %119 = arith.maximumf %117, %118 : vector<32x128xf32>
    %c0_66 = arith.constant 0 : index
    %c0_67 = arith.constant 0 : index
    %120 = vector.load %arg7[%c0_66, %c0_67] : memref<32x128xf32, #tpu.memory_space<vmem>>, vector<32x128xf32>
    tpu.vector_store %arg7[%c0_66, %c0_67], %119 {strides = array<i32>} : memref<32x128xf32, #tpu.memory_space<vmem>>, vector<32x128xf32>,
    return
  }
}

</mosaic_0001>

<llo_original>
// kernel: tile.23
$region0: #{tile.23}
  #allocation0 [shape = 's32[1]{0}', space=sflag, size = 0x4, scoped, tag = 'scoped memory for tile.23']
  %s0 = inlined_call_operand.vmem [shape: f32[8], index: 0, kind: input, shape index: {}]
  %s1 = inlined_call_operand.vmem [shape: f32[16,8], index: 1, kind: output, shape index: {}]
  // Predicated region
  $region2: #{tile.23} parent=0 // pred_check
    _
  $region3: #{tile.23} parent=0 // pred_check_branch
    %3 = sbr.rel (0) target = $region5
  $region4: #{tile.23} parent=0 // pred_region
    _
  $region5: #{tile.23} parent=0 // pred_fallthru
    _
  %v4 = vld [vmem:[%s0] ss:$0 sm:$0xff]
  %5 = vst [vmem:[%s1] sm:$0xff] %v4
  %s6 = scalar_lea.vmem %s1, 8
  %7 = vst [vmem:[%s6] sm:$0xff] %v4

// kernel: tile.24
$region0: #{tile.24}
  %s0 = inlined_call_operand.vmem [shape: f32[16,8], index: 0, kind: input, shape index: {}]
  %s1 = inlined_call_operand.vmem [shape: f32[1,128], index: 1, kind: output, shape index: {}]
  $region1: #{tile.24} parent=0
    #allocation0 [shape = 'u8[4096]{0}', space=vmem, size = 0x1000, scoped, tag = 'scoped mem for output reshape']
    %v2 = vld [vmem:[%s0] sm:$0x1]
    %vm3 = vcmask 64512
    %4 = vst.msk [vmem:[#allocation0] sm:$0x1] %vm3, %v2
    %s5 = scalar_lea.vmem %s0, 15
    %v6 = vld [vmem:[%s5] sm:$0x1]
    %7 = vrot.lane.b32.xlu0 %v6, 120
    %v8 = vpop.permute.xlu0 %7
    %vm9 = vcmask 1048512
    %10 = vst.msk [vmem:[#allocation0] sm:$0x1] %vm9, %v8
    %s11 = scalar_lea.vmem %s0, 14
    %v12 = vld [vmem:[%s11] sm:$0x1]
    %13 = vrot.lane.b32.xlu0 %v12, 112
    %v14 = vpop.permute.xlu0 %13
    %vm15 = vcmask 982912
    %16 = vst.msk [vmem:[#allocation0] sm:$0x1] %vm15, %v14
    %s17 = scalar_lea.vmem %s0, 13
    %v18 = vld [vmem:[%s17] sm:$0x1]
    %19 = vrot.lane.b32.xlu0 %v18, 104
    %v20 = vpop.permute.xlu0 %19
    %vm21 = vcmask 917312
    %22 = vst.msk [vmem:[#allocation0] sm:$0x1] %vm21, %v20
    %s23 = scalar_lea.vmem %s0, 12
    %v24 = vld [vmem:[%s23] sm:$0x1]
    %25 = vrot.lane.b32.xlu0 %v24, 96
    %v26 = vpop.permute.xlu0 %25
    %vm27 = vcmask 851712
    %28 = vst.msk [vmem:[#allocation0] sm:$0x1] %vm27, %v26
    %s29 = scalar_lea.vmem %s0, 11
    %v30 = vld [vmem:[%s29] sm:$0x1]
    %31 = vrot.lane.b32.xlu0 %v30, 88
    %v32 = vpop.permute.xlu0 %31
    %vm33 = vcmask 786112
    %34 = vst.msk [vmem:[#allocation0] sm:$0x1] %vm33, %v32
    %s35 = scalar_lea.vmem %s0, 10
    %v36 = vld [vmem:[%s35] sm:$0x1]
    %37 = vrot.lane.b32.xlu0 %v36, 80
    %v38 = vpop.permute.xlu0 %37
    %vm39 = vcmask 720512
    %40 = vst.msk [vmem:[#allocation0] sm:$0x1] %vm39, %v38
    %s41 = scalar_lea.vmem %s0, 9
    %v42 = vld [vmem:[%s41] sm:$0x1]
    %43 = vrot.lane.b32.xlu0 %v42, 72
    %v44 = vpop.permute.xlu0 %43
    %vm45 = vcmask 654912
    %46 = vst.msk [vmem:[#allocation0] sm:$0x1] %vm45, %v44
    %s47 = scalar_lea.vmem %s0, 8
    %v48 = vld [vmem:[%s47] sm:$0x1]
    %49 = vrot.lane.b32.xlu0 %v48, 64
    %v50 = vpop.permute.xlu0 %49
    %vm51 = vcmask 589312
    %52 = vst.msk [vmem:[#allocation0] sm:$0x1] %vm51, %v50
    %s53 = scalar_lea.vmem %s0, 7
    %v54 = vld [vmem:[%s53] sm:$0x1]
    %55 = vrot.lane.b32.xlu0 %v54, 56
    %v56 = vpop.permute.xlu0 %55
    %vm57 = vcmask 523712
    %58 = vst.msk [vmem:[#allocation0] sm:$0x1] %vm57, %v56
    %s59 = scalar_lea.vmem %s0, 6
    %v60 = vld [vmem:[%s59] sm:$0x1]
    %61 = vrot.lane.b32.xlu0 %v60, 48
    %v62 = vpop.permute.xlu0 %61
    %vm63 = vcmask 458112
    %64 = vst.msk [vmem:[#allocation0] sm:$0x1] %vm63, %v62
    %s65 = scalar_lea.vmem %s0, 5
    %v66 = vld [vmem:[%s65] sm:$0x1]
    %67 = vrot.lane.b32.xlu0 %v66, 40
    %v68 = vpop.permute.xlu0 %67
    %vm69 = vcmask 392512
    %70 = vst.msk [vmem:[#allocation0] sm:$0x1] %vm69, %v68
    %s71 = scalar_lea.vmem %s0, 4
    %v72 = vld [vmem:[%s71] sm:$0x1]
    %73 = vrot.lane.b32.xlu0 %v72, 32
    %v74 = vpop.permute.xlu0 %73
    %vm75 = vcmask 326912
    %76 = vst.msk [vmem:[#allocation0] sm:$0x1] %vm75, %v74
    %s77 = scalar_lea.vmem %s0, 3
    %v78 = vld [vmem:[%s77] sm:$0x1]
    %79 = vrot.lane.b32.xlu0 %v78, 24
    %v80 = vpop.permute.xlu0 %79
    %vm81 = vcmask 261312
    %82 = vst.msk [vmem:[#allocation0] sm:$0x1] %vm81, %v80
    %s83 = scalar_lea.vmem %s0, 2
    %v84 = vld [vmem:[%s83] sm:$0x1]
    %85 = vrot.lane.b32.xlu0 %v84, 16
    %v86 = vpop.permute.xlu0 %85
    %vm87 = vcmask 195712
    %88 = vst.msk [vmem:[#allocation0] sm:$0x1] %vm87, %v86
    %s89 = scalar_lea.vmem %s0, 1
    %v90 = vld [vmem:[%s89] sm:$0x1]
    %91 = vrot.lane.b32.xlu0 %v90, 8
    %v92 = vpop.permute.xlu0 %91
    %vm93 = vcmask 130112
    %94 = vst.msk [vmem:[#allocation0] sm:$0x1] %vm93, %v92
    %s96 = ssub.s32 2, 1
    %v97 = vld [vmem:[#allocation0] sm:%s96]
    %s99 = ssub.s32 2, 1
    %100 = vst [vmem:[%s1] sm:%s99] %v97

// kernel: residual_block_forward.1
$region0: #{residual_block_forward.1}
  #allocation0 [shape = 'u32[]', space=smem, size = 0x4, offset = 0x4, fixed_abs, tag = 'smem constant byte address 0x4 - core index']
  #allocation1 [shape = 'u32[72,128]{1,0:T(1,128)}', space=vmem, size = 0x9000, scoped, tag = 'internal scratch']
  #allocation2 [shape = 'f32[2,18,128]{2,1,0:T(8,128)}', space=vmem, size = 0x6000, scoped, tag = 'scratch operand']
  %s0 = inlined_call_operand.vmem [shape: f32[2,18,128], index: 0, kind: input, shape index: {}]
  %s1 = inlined_call_operand.vmem [shape: f32[384,128], index: 1, kind: input, shape index: {}]
  %s2 = inlined_call_operand.vmem [shape: f32[1,128], index: 2, kind: input, shape index: {}]
  %s3 = inlined_call_operand.vmem [shape: f32[1,128], index: 3, kind: input, shape index: {}]
  %s4 = inlined_call_operand.vmem [shape: f32[384,128], index: 4, kind: input, shape index: {}]
  %s5 = inlined_call_operand.vmem [shape: f32[1,128], index: 5, kind: input, shape index: {}]
  %s6 = inlined_call_operand.vmem [shape: f32[1,128], index: 6, kind: input, shape index: {}]
  %s7 = inlined_call_operand.vmem [shape: f32[32,128], index: 7, kind: output, shape index: {}]
  %s8 = sld [smem:[#allocation0]]
  $region38: #{residual_block_forward.1} parent=0
    _
  %s10 = ssub.s32 1, %s8
  %s11 = scalar_select 0, %s10, %s8
  // Predicated region
  $region2: #{residual_block_forward.1} parent=0 // pred_check
    _
  $region3: #{residual_block_forward.1} parent=0 // pred_check_branch
    %13 = sbr.rel (0) target = $region5
  $region4: #{residual_block_forward.1} parent=0 // pred_region
    _
  $region5: #{residual_block_forward.1} parent=0 // pred_fallthru
    _
  // Predicated region
  $region6: #{residual_block_forward.1} parent=0 // pred_check
    _
  $region7: #{residual_block_forward.1} parent=0 // pred_check_branch
    %15 = sbr.rel (0) target = $region9
  $region8: #{residual_block_forward.1} parent=0 // pred_region
    _
  $region9: #{residual_block_forward.1} parent=0 // pred_fallthru
    _
  // Predicated region
  $region10: #{residual_block_forward.1} parent=0 // pred_check
    _
  $region11: #{residual_block_forward.1} parent=0 // pred_check_branch
    %17 = sbr.rel (0) target = $region13
  $region12: #{residual_block_forward.1} parent=0 // pred_region
    _
  $region13: #{residual_block_forward.1} parent=0 // pred_fallthru
    _
  // Predicated region
  $region14: #{residual_block_forward.1} parent=0 // pred_check
    _
  $region15: #{residual_block_forward.1} parent=0 // pred_check_branch
    %19 = sbr.rel (0) target = $region17
  $region16: #{residual_block_forward.1} parent=0 // pred_region
    _
  $region17: #{residual_block_forward.1} parent=0 // pred_fallthru
    _
  // Predicated region
  $region18: #{residual_block_forward.1} parent=0 // pred_check
    _
  $region19: #{residual_block_forward.1} parent=0 // pred_check_branch
    %21 = sbr.rel (0) target = $region21
  $region20: #{residual_block_forward.1} parent=0 // pred_region
    _
  $region21: #{residual_block_forward.1} parent=0 // pred_fallthru
    _
  // Predicated region
  $region22: #{residual_block_forward.1} parent=0 // pred_check
    _
  $region23: #{residual_block_forward.1} parent=0 // pred_check_branch
    %23 = sbr.rel (0) target = $region25
  $region24: #{residual_block_forward.1} parent=0 // pred_region
    _
  $region25: #{residual_block_forward.1} parent=0 // pred_fallthru
    _
  // Predicated region
  $region26: #{residual_block_forward.1} parent=0 // pred_check
    _
  $region27: #{residual_block_forward.1} parent=0 // pred_check_branch
    %25 = sbr.rel (0) target = $region29
  $region28: #{residual_block_forward.1} parent=0 // pred_region
    _
  $region29: #{residual_block_forward.1} parent=0 // pred_fallthru
    _
  %v26 = vlaneseq
  %v27 = vshrl.u32 %v26, 7
  %v28 = vadd.s32 %v27, 8
  %v29 = vadd.s32 %v27, 16
  %v30 = vadd.s32 %v27, 24
  %v31 = vadd.s32 %v27, 32
  %v32 = vadd.s32 %v27, 40
  %v33 = vadd.s32 %v27, 48
  %v34 = vadd.s32 %v27, 56
  %v35 = vadd.s32 %v27, 64
  %v36 = vadd.s32 %v27, 72
  %v37 = vadd.s32 %v27, 80
  %v38 = vadd.s32 %v27, 88
  %v39 = vadd.s32 %v27, 96
  %v40 = vadd.s32 %v27, 104
  %v41 = vadd.s32 %v27, 112
  %v42 = vadd.s32 %v27, 120
  %v43 = vlaneseq
  %v44 = vand.u32 %v43, 127
  %vm45 = vcmp.lt.s32.totalorder %v27, 0
  %v46 = vsub.s32 0, %v27
  %v47 = vsel %vm45, %v46, %v27
  %v48 = vshrl.u32 %v47, 3
  %v49 = vand.u32 %v47, 7
  %v50 = vsub.s32 0, %v49
  %v51 = vsel %vm45, %v50, %v49
  %vm52 = vcmp.lt.s32.totalorder %v28, 0
  %v53 = vsub.s32 0, %v28
  %v54 = vsel %vm52, %v53, %v28
  %v55 = vshrl.u32 %v54, 3
  %v56 = vand.u32 %v54, 7
  %v57 = vsub.s32 0, %v56
  %v58 = vsel %vm52, %v57, %v56
  %vm59 = vcmp.lt.s32.totalorder %v29, 0
  %v60 = vsub.s32 0, %v29
  %v61 = vsel %vm59, %v60, %v29
  %v62 = vshrl.u32 %v61, 3
  %v63 = vand.u32 %v61, 7
  %v64 = vsub.s32 0, %v63
  %v65 = vsel %vm59, %v64, %v63
  %vm66 = vcmp.lt.s32.totalorder %v30, 0
  %v67 = vsub.s32 0, %v30
  %v68 = vsel %vm66, %v67, %v30
  %v69 = vshrl.u32 %v68, 3
  %v70 = vand.u32 %v68, 7
  %v71 = vsub.s32 0, %v70
  %v72 = vsel %vm66, %v71, %v70
  %vm73 = vcmp.lt.s32.totalorder %v31, 0
  %v74 = vsub.s32 0, %v31
  %v75 = vsel %vm73, %v74, %v31
  %v76 = vshrl.u32 %v75, 3
  %v77 = vand.u32 %v75, 7
  %v78 = vsub.s32 0, %v77
  %v79 = vsel %vm73, %v78, %v77
  %vm80 = vcmp.lt.s32.totalorder %v32, 0
  %v81 = vsub.s32 0, %v32
  %v82 = vsel %vm80, %v81, %v32
  %v83 = vshrl.u32 %v82, 3
  %v84 = vand.u32 %v82, 7
  %v85 = vsub.s32 0, %v84
  %v86 = vsel %vm80, %v85, %v84
  %vm87 = vcmp.lt.s32.totalorder %v33, 0
  %v88 = vsub.s32 0, %v33
  %v89 = vsel %vm87, %v88, %v33
  %v90 = vshrl.u32 %v89, 3
  %v91 = vand.u32 %v89, 7
  %v92 = vsub.s32 0, %v91
  %v93 = vsel %vm87, %v92, %v91
  %vm94 = vcmp.lt.s32.totalorder %v34, 0
  %v95 = vsub.s32 0, %v34
  %v96 = vsel %vm94, %v95, %v34
  %v97 = vshrl.u32 %v96, 3
  %v98 = vand.u32 %v96, 7
  %v99 = vsub.s32 0, %v98
  %v100 = vsel %vm94, %v99, %v98
  %vm101 = vcmp.lt.s32.totalorder %v35, 0
  %v102 = vsub.s32 0, %v35
  %v103 = vsel %vm101, %v102, %v35
  %v104 = vshrl.u32 %v103, 3
  %v105 = vand.u32 %v103, 7
  %v106 = vsub.s32 0, %v105
  %v107 = vsel %vm101, %v106, %v105
  %vm108 = vcmp.lt.s32.totalorder %v36, 0
  %v109 = vsub.s32 0, %v36
  %v110 = vsel %vm108, %v109, %v36
  %v111 = vshrl.u32 %v110, 3
  %v112 = vand.u32 %v110, 7
  %v113 = vsub.s32 0, %v112
  %v114 = vsel %vm108, %v113, %v112
  %vm115 = vcmp.lt.s32.totalorder %v37, 0
  %v116 = vsub.s32 0, %v37
  %v117 = vsel %vm115, %v116, %v37
  %v118 = vshrl.u32 %v117, 3
  %v119 = vand.u32 %v117, 7
  %v120 = vsub.s32 0, %v119
  %v121 = vsel %vm115, %v120, %v119
  %vm122 = vcmp.lt.s32.totalorder %v38, 0
  %v123 = vsub.s32 0, %v38
  %v124 = vsel %vm122, %v123, %v38
  %v125 = vshrl.u32 %v124, 3
  %v126 = vand.u32 %v124, 7
  %v127 = vsub.s32 0, %v126
  %v128 = vsel %vm122, %v127, %v126
  %vm129 = vcmp.lt.s32.totalorder %v39, 0
  %v130 = vsub.s32 0, %v39
  %v131 = vsel %vm129, %v130, %v39
  %v132 = vshrl.u32 %v131, 3
  %v133 = vand.u32 %v131, 7
  %v134 = vsub.s32 0, %v133
  %v135 = vsel %vm129, %v134, %v133
  %vm136 = vcmp.lt.s32.totalorder %v40, 0
  %v137 = vsub.s32 0, %v40
  %v138 = vsel %vm136, %v137, %v40
  %v139 = vshrl.u32 %v138, 3
  %v140 = vand.u32 %v138, 7
  %v141 = vsub.s32 0, %v140
  %v142 = vsel %vm136, %v141, %v140
  %vm143 = vcmp.lt.s32.totalorder %v41, 0
  %v144 = vsub.s32 0, %v41
  %v145 = vsel %vm143, %v144, %v41
  %v146 = vshrl.u32 %v145, 3
  %v147 = vand.u32 %v145, 7
  %v148 = vsub.s32 0, %v147
  %v149 = vsel %vm143, %v148, %v147
  %vm150 = vcmp.lt.s32.totalorder %v42, 0
  %v151 = vsub.s32 0, %v42
  %v152 = vsel %vm150, %v151, %v42
  %v153 = vshrl.u32 %v152, 3
  %v154 = vand.u32 %v152, 7
  %v155 = vsub.s32 0, %v154
  %v156 = vsel %vm150, %v155, %v154
  %vm157 = vcmp.ne.s32.totalorder %v51, 0
  %vm158 = vcmp.ne.s32.totalorder %v58, 0
  %vm159 = vcmp.ne.s32.totalorder %v65, 0
  %vm160 = vcmp.ne.s32.totalorder %v72, 0
  %vm161 = vcmp.ne.s32.totalorder %v79, 0
  %vm162 = vcmp.ne.s32.totalorder %v86, 0
  %vm163 = vcmp.ne.s32.totalorder %v93, 0
  %vm164 = vcmp.ne.s32.totalorder %v100, 0
  %vm165 = vcmp.ne.s32.totalorder %v107, 0
  %vm166 = vcmp.ne.s32.totalorder %v114, 0
  %vm167 = vcmp.ne.s32.totalorder %v121, 0
  %vm168 = vcmp.ne.s32.totalorder %v128, 0
  %vm169 = vcmp.ne.s32.totalorder %v135, 0
  %vm170 = vcmp.ne.s32.totalorder %v142, 0
  %vm171 = vcmp.ne.s32.totalorder %v149, 0
  %vm172 = vcmp.ne.s32.totalorder %v156, 0
  %vm173 = vcmp.lt.s32.totalorder %v51, 0
  %vm174 = vcmp.lt.s32.totalorder %v58, 0
  %vm175 = vcmp.lt.s32.totalorder %v65, 0
  %vm176 = vcmp.lt.s32.totalorder %v72, 0
  %vm177 = vcmp.lt.s32.totalorder %v79, 0
  %vm178 = vcmp.lt.s32.totalorder %v86, 0
  %vm179 = vcmp.lt.s32.totalorder %v93, 0
  %vm180 = vcmp.lt.s32.totalorder %v100, 0
  %vm181 = vcmp.lt.s32.totalorder %v107, 0
  %vm182 = vcmp.lt.s32.totalorder %v114, 0
  %vm183 = vcmp.lt.s32.totalorder %v121, 0
  %vm184 = vcmp.lt.s32.totalorder %v128, 0
  %vm185 = vcmp.lt.s32.totalorder %v135, 0
  %vm186 = vcmp.lt.s32.totalorder %v142, 0
  %vm187 = vcmp.lt.s32.totalorder %v149, 0
  %vm188 = vcmp.lt.s32.totalorder %v156, 0
  %vm189 = vmand %vm173, %vm157
  %vm190 = vmand %vm174, %vm158
  %vm191 = vmand %vm175, %vm159
  %vm192 = vmand %vm176, %vm160
  %vm193 = vmand %vm177, %vm161
  %vm194 = vmand %vm178, %vm162
  %vm195 = vmand %vm179, %vm163
  %vm196 = vmand %vm180, %vm164
  %vm197 = vmand %vm181, %vm165
  %vm198 = vmand %vm182, %vm166
  %vm199 = vmand %vm183, %vm167
  %vm200 = vmand %vm184, %vm168
  %vm201 = vmand %vm185, %vm169
  %vm202 = vmand %vm186, %vm170
  %vm203 = vmand %vm187, %vm171
  %vm204 = vmand %vm188, %vm172
  %v205 = vadd.s32 %v51, 8
  %v206 = vadd.s32 %v58, 8
  %v207 = vadd.s32 %v65, 8
  %v208 = vadd.s32 %v72, 8
  %v209 = vadd.s32 %v79, 8
  %v210 = vadd.s32 %v86, 8
  %v211 = vadd.s32 %v93, 8
  %v212 = vadd.s32 %v100, 8
  %v213 = vadd.s32 %v107, 8
  %v214 = vadd.s32 %v114, 8
  %v215 = vadd.s32 %v121, 8
  %v216 = vadd.s32 %v128, 8
  %v217 = vadd.s32 %v135, 8
  %v218 = vadd.s32 %v142, 8
  %v219 = vadd.s32 %v149, 8
  %v220 = vadd.s32 %v156, 8
  %v221 = vsel %vm189, %v205, %v51
  %v222 = vsel %vm190, %v206, %v58
  %v223 = vsel %vm191, %v207, %v65
  %v224 = vsel %vm192, %v208, %v72
  %v225 = vsel %vm193, %v209, %v79
  %v226 = vsel %vm194, %v210, %v86
  %v227 = vsel %vm195, %v211, %v93
  %v228 = vsel %vm196, %v212, %v100
  %v229 = vsel %vm197, %v213, %v107
  %v230 = vsel %vm198, %v214, %v114
  %v231 = vsel %vm199, %v215, %v121
  %v232 = vsel %vm200, %v216, %v128
  %v233 = vsel %vm201, %v217, %v135
  %v234 = vsel %vm202, %v218, %v142
  %v235 = vsel %vm203, %v219, %v149
  %v236 = vsel %vm204, %v220, %v156
  %vm237 = vcmp.lt.s32.totalorder %v44, 0
  %v238 = vsub.s32 0, %v44
  %v239 = vsel %vm237, %v238, %v44
  %v240 = vshrl.u32 %v239, 3
  %v241 = vand.u32 %v239, 7
  %v242 = vsub.s32 0, %v241
  %v243 = vsel %vm237, %v242, %v241
  %vm244 = vcmp.ne.s32.totalorder %v243, 0
  %vm245 = vcmp.lt.s32.totalorder %v243, 0
  %vm246 = vmand %vm245, %vm244
  %v247 = vadd.s32 %v243, 8
  %v248 = vsel %vm246, %v247, %v243
  %vm249 = vcmp.eq.s32.totalorder %v221, %v248
  %vm250 = vcmp.eq.s32.totalorder %v222, %v248
  %vm251 = vcmp.eq.s32.totalorder %v223, %v248
  %vm252 = vcmp.eq.s32.totalorder %v224, %v248
  %vm253 = vcmp.eq.s32.totalorder %v225, %v248
  %vm254 = vcmp.eq.s32.totalorder %v226, %v248
  %vm255 = vcmp.eq.s32.totalorder %v227, %v248
  %vm256 = vcmp.eq.s32.totalorder %v228, %v248
  %vm257 = vcmp.eq.s32.totalorder %v229, %v248
  %vm258 = vcmp.eq.s32.totalorder %v230, %v248
  %vm259 = vcmp.eq.s32.totalorder %v231, %v248
  %vm260 = vcmp.eq.s32.totalorder %v232, %v248
  %vm261 = vcmp.eq.s32.totalorder %v233, %v248
  %vm262 = vcmp.eq.s32.totalorder %v234, %v248
  %vm263 = vcmp.eq.s32.totalorder %v235, %v248
  %vm264 = vcmp.eq.s32.totalorder %v236, %v248
  %v265 = vsel %vm249, 1, 0
  %v266 = vsel %vm250, 1, 0
  %v267 = vsel %vm251, 1, 0
  %v268 = vsel %vm252, 1, 0
  %v269 = vsel %vm253, 1, 0
  %v270 = vsel %vm254, 1, 0
  %v271 = vsel %vm255, 1, 0
  %v272 = vsel %vm256, 1, 0
  %v273 = vsel %vm257, 1, 0
  %v274 = vsel %vm258, 1, 0
  %v275 = vsel %vm259, 1, 0
  %v276 = vsel %vm260, 1, 0
  %v277 = vsel %vm261, 1, 0
  %v278 = vsel %vm262, 1, 0
  %v279 = vsel %vm263, 1, 0
  %v280 = vsel %vm264, 1, 0
  %v281 = vcvt.s32.f32 %v265
  %v282 = vcvt.s32.f32 %v266
  %v283 = vcvt.s32.f32 %v267
  %v284 = vcvt.s32.f32 %v268
  %v285 = vcvt.s32.f32 %v269
  %v286 = vcvt.s32.f32 %v270
  %v287 = vcvt.s32.f32 %v271
  %v288 = vcvt.s32.f32 %v272
  %v289 = vcvt.s32.f32 %v273
  %v290 = vcvt.s32.f32 %v274
  %v291 = vcvt.s32.f32 %v275
  %v292 = vcvt.s32.f32 %v276
  %v293 = vcvt.s32.f32 %v277
  %v294 = vcvt.s32.f32 %v278
  %v295 = vcvt.s32.f32 %v279
  %v296 = vcvt.s32.f32 %v280
  %v297 = vld [vmem:[%s0] sm:$0xff]
  %v298 = vld [vmem:[%s0 + $0x8] sm:$0xff]
  %v299 = vld [vmem:[%s0 + $0x18] sm:$0xff]
  %v300 = vld [vmem:[%s0 + $0x20] sm:$0xff]
  %v301 = vld [vmem:[%s0 + $0x1] sm:$0xff]
  %v302 = vld [vmem:[%s0 + $0x9] sm:$0xff]
  %v303 = vld [vmem:[%s0 + $0x19] sm:$0xff]
  %v304 = vld [vmem:[%s0 + $0x21] sm:$0xff]
  %v305 = vld [vmem:[%s0 + $0x2] sm:$0xff]
  %v306 = vld [vmem:[%s0 + $0xa] sm:$0xff]
  %v307 = vld [vmem:[%s0 + $0x1a] sm:$0xff]
  %v308 = vld [vmem:[%s0 + $0x22] sm:$0xff]
  %v309 = vld [vmem:[%s1] sm:$0xff]
  %v310 = vld [vmem:[%s1 + $0x8] sm:$0xff]
  %v311 = vld [vmem:[%s1 + $0x10] sm:$0xff]
  %v312 = vld [vmem:[%s1 + $0x18] sm:$0xff]
  %v313 = vld [vmem:[%s1 + $0x20] sm:$0xff]
  %v314 = vld [vmem:[%s1 + $0x28] sm:$0xff]
  %v315 = vld [vmem:[%s1 + $0x30] sm:$0xff]
  %v316 = vld [vmem:[%s1 + $0x38] sm:$0xff]
  %v317 = vld [vmem:[%s1 + $0x40] sm:$0xff]
  %v318 = vld [vmem:[%s1 + $0x48] sm:$0xff]
  %v319 = vld [vmem:[%s1 + $0x50] sm:$0xff]
  %v320 = vld [vmem:[%s1 + $0x58] sm:$0xff]
  %v321 = vld [vmem:[%s1 + $0x60] sm:$0xff]
  %v322 = vld [vmem:[%s1 + $0x68] sm:$0xff]
  %v323 = vld [vmem:[%s1 + $0x70] sm:$0xff]
  %v324 = vld [vmem:[%s1 + $0x78] sm:$0xff]
  %v325 = vld [vmem:[%s1 + $0x80] sm:$0xff]
  %v326 = vld [vmem:[%s1 + $0x88] sm:$0xff]
  %v327 = vld [vmem:[%s1 + $0x90] sm:$0xff]
  %v328 = vld [vmem:[%s1 + $0x98] sm:$0xff]
  %v329 = vld [vmem:[%s1 + $0xa0] sm:$0xff]
  %v330 = vld [vmem:[%s1 + $0xa8] sm:$0xff]
  %v331 = vld [vmem:[%s1 + $0xb0] sm:$0xff]
  %v332 = vld [vmem:[%s1 + $0xb8] sm:$0xff]
  %v333 = vld [vmem:[%s1 + $0xc0] sm:$0xff]
  %v334 = vld [vmem:[%s1 + $0xc8] sm:$0xff]
  %v335 = vld [vmem:[%s1 + $0xd0] sm:$0xff]
  %v336 = vld [vmem:[%s1 + $0xd8] sm:$0xff]
  %v337 = vld [vmem:[%s1 + $0xe0] sm:$0xff]
  %v338 = vld [vmem:[%s1 + $0xe8] sm:$0xff]
  %v339 = vld [vmem:[%s1 + $0xf0] sm:$0xff]
  %v340 = vld [vmem:[%s1 + $0xf8] sm:$0xff]
  %v341 = vld [vmem:[%s1 + $0x100] sm:$0xff]
  %v342 = vld [vmem:[%s1 + $0x108] sm:$0xff]
  %v343 = vld [vmem:[%s1 + $0x110] sm:$0xff]
  %v344 = vld [vmem:[%s1 + $0x118] sm:$0xff]
  %v345 = vld [vmem:[%s1 + $0x120] sm:$0xff]
  %v346 = vld [vmem:[%s1 + $0x128] sm:$0xff]
  %v347 = vld [vmem:[%s1 + $0x130] sm:$0xff]
  %v348 = vld [vmem:[%s1 + $0x138] sm:$0xff]
  %v349 = vld [vmem:[%s1 + $0x140] sm:$0xff]
  %v350 = vld [vmem:[%s1 + $0x148] sm:$0xff]
  %v351 = vld [vmem:[%s1 + $0x150] sm:$0xff]
  %v352 = vld [vmem:[%s1 + $0x158] sm:$0xff]
  %v353 = vld [vmem:[%s1 + $0x160] sm:$0xff]
  %v354 = vld [vmem:[%s1 + $0x168] sm:$0xff]
  %v355 = vld [vmem:[%s1 + $0x170] sm:$0xff]
  %v356 = vld [vmem:[%s1 + $0x178] sm:$0xff]
  %357 = vmatpush.msra.mxu0 %v324
  %358 = vmatpush.msra.mxu0 %v323
  %359 = vmatpush.msra.mxu0 %v322
  %360 = vmatpush.msra.mxu0 %v321
  %361 = vmatpush.msra.mxu0 %v320
  %362 = vmatpush.msra.mxu0 %v319
  %363 = vmatpush.msra.mxu0 %v318
  %364 = vmatpush.msra.mxu0 %v317
  %365 = vmatpush.msra.mxu0 %v316
  %366 = vmatpush.msra.mxu0 %v315
  %367 = vmatpush.msra.mxu0 %v314
  %368 = vmatpush.msra.mxu0 %v313
  %369 = vmatpush.msra.mxu0 %v312
  %370 = vmatpush.msra.mxu0 %v311
  %371 = vmatpush.msra.mxu0 %v310
  %372 = vmatpush.msra.mxu0 %v309
  %373 = vmatmul.f32.gmra.mxu0 %v297
  %v374 = vpop.f32.mrf.mxu0
  %v375 = vadd.f32 0.0, %v374
  %376 = vmatmul.f32.gmra.mxu0 %v298
  %v377 = vpop.f32.mrf.mxu0
  %v378 = vadd.f32 0.0, %v377
  %379 = vmatmul.f32.gmra.mxu0 %v299
  %v380 = vpop.f32.mrf.mxu0
  %v381 = vadd.f32 0.0, %v380
  %382 = vmatmul.f32.gmra.mxu0 %v300
  %v383 = vpop.f32.mrf.mxu0
  %v384 = vadd.f32 0.0, %v383
  %385 = vdwg.mxu0
  %386 = vmatpush.msra.mxu0 %v340
  %387 = vmatpush.msra.mxu0 %v339
  %388 = vmatpush.msra.mxu0 %v338
  %389 = vmatpush.msra.mxu0 %v337
  %390 = vmatpush.msra.mxu0 %v336
  %391 = vmatpush.msra.mxu0 %v335
  %392 = vmatpush.msra.mxu0 %v334
  %393 = vmatpush.msra.mxu0 %v333
  %394 = vmatpush.msra.mxu0 %v332
  %395 = vmatpush.msra.mxu0 %v331
  %396 = vmatpush.msra.mxu0 %v330
  %397 = vmatpush.msra.mxu0 %v329
  %398 = vmatpush.msra.mxu0 %v328
  %399 = vmatpush.msra.mxu0 %v327
  %400 = vmatpush.msra.mxu0 %v326
  %401 = vmatpush.msra.mxu0 %v325
  %402 = vmatmul.f32.gmra.mxu0 %v301
  %v403 = vpop.f32.mrf.mxu0
  %v404 = vadd.f32 %v375, %v403
  %405 = vmatmul.f32.gmra.mxu0 %v302
  %v406 = vpop.f32.mrf.mxu0
  %v407 = vadd.f32 %v378, %v406
  %408 = vmatmul.f32.gmra.mxu0 %v303
  %v409 = vpop.f32.mrf.mxu0
  %v410 = vadd.f32 %v381, %v409
  %411 = vmatmul.f32.gmra.mxu0 %v304
  %v412 = vpop.f32.mrf.mxu0
  %v413 = vadd.f32 %v384, %v412
  %414 = vdwg.mxu0
  %415 = vmatpush.msra.mxu0 %v356
  %416 = vmatpush.msra.mxu0 %v355
  %417 = vmatpush.msra.mxu0 %v354
  %418 = vmatpush.msra.mxu0 %v353
  %419 = vmatpush.msra.mxu0 %v352
  %420 = vmatpush.msra.mxu0 %v351
  %421 = vmatpush.msra.mxu0 %v350
  %422 = vmatpush.msra.mxu0 %v349
  %423 = vmatpush.msra.mxu0 %v348
  %424 = vmatpush.msra.mxu0 %v347
  %425 = vmatpush.msra.mxu0 %v346
  %426 = vmatpush.msra.mxu0 %v345
  %427 = vmatpush.msra.mxu0 %v344
  %428 = vmatpush.msra.mxu0 %v343
  %429 = vmatpush.msra.mxu0 %v342
  %430 = vmatpush.msra.mxu0 %v341
  %431 = vmatmul.f32.gmra.mxu0 %v305
  %v432 = vpop.f32.mrf.mxu0
  %v433 = vadd.f32 %v404, %v432
  %434 = vmatmul.f32.gmra.mxu0 %v306
  %v435 = vpop.f32.mrf.mxu0
  %v436 = vadd.f32 %v407, %v435
  %437 = vmatmul.f32.gmra.mxu0 %v307
  %v438 = vpop.f32.mrf.mxu0
  %v439 = vadd.f32 %v410, %v438
  %440 = vmatmul.f32.gmra.mxu0 %v308
  %v441 = vpop.f32.mrf.mxu0
  %v442 = vadd.f32 %v413, %v441
  %443 = vdwg.mxu0
  %444 = vmatpush.msra.mxu0 %v296
  %445 = vmatpush.msra.mxu0 %v295
  %446 = vmatpush.msra.mxu0 %v294
  %447 = vmatpush.msra.mxu0 %v293
  %448 = vmatpush.msra.mxu0 %v292
  %449 = vmatpush.msra.mxu0 %v291
  %450 = vmatpush.msra.mxu0 %v290
  %451 = vmatpush.msra.mxu0 %v289
  %452 = vmatpush.msra.mxu0 %v288
  %453 = vmatpush.msra.mxu0 %v287
  %454 = vmatpush.msra.mxu0 %v286
  %455 = vmatpush.msra.mxu0 %v285
  %456 = vmatpush.msra.mxu0 %v284
  %457 = vmatpush.msra.mxu0 %v283
  %458 = vmatpush.msra.mxu0 %v282
  %459 = vmatpush.msra.mxu0 %v281
  %460 = vmatmul.f32.gmra.mxu0 %v433
  %v461 = vpop.f32.mrf.mxu0
  %v462 = vadd.f32 0.0, %v461
  %463 = vmatmul.f32.gmra.mxu0 %v436
  %v464 = vpop.f32.mrf.mxu0
  %v465 = vadd.f32 0.0, %v464
  %466 = vmatmul.f32.gmra.mxu0 %v439
  %v467 = vpop.f32.mrf.mxu0
  %v468 = vadd.f32 0.0, %v467
  %469 = vmatmul.f32.gmra.mxu0 %v442
  %v470 = vpop.f32.mrf.mxu0
  %v471 = vadd.f32 0.0, %v470
  %472 = vdwg.mxu0
  %v473 = vadd.f32 %v462, %v465
  %v474 = vadd.f32 %v473, %v468
  %v475 = vadd.f32 %v474, %v471
  %v476 = vrot.slane %v475, 4
  %v477 = vadd.f32 %v475, %v476
  %v478 = vrot.slane %v477, 2
  %v479 = vadd.f32 %v477, %v478
  %v480 = vrot.slane %v479, 1
  %v481 = vadd.f32 %v479, %v480
  %v482 = vmul.f32 %v481, 0.001953125
  %v483 = vmul.f32 %v433, %v433
  %v484 = vmul.f32 %v436, %v436
  %v485 = vmul.f32 %v439, %v439
  %v486 = vmul.f32 %v442, %v442
  %487 = vmatpush.msra.mxu0 %v296
  %488 = vmatpush.msra.mxu0 %v295
  %489 = vmatpush.msra.mxu0 %v294
  %490 = vmatpush.msra.mxu0 %v293
  %491 = vmatpush.msra.mxu0 %v292
  %492 = vmatpush.msra.mxu0 %v291
  %493 = vmatpush.msra.mxu0 %v290
  %494 = vmatpush.msra.mxu0 %v289
  %495 = vmatpush.msra.mxu0 %v288
  %496 = vmatpush.msra.mxu0 %v287
  %497 = vmatpush.msra.mxu0 %v286
  %498 = vmatpush.msra.mxu0 %v285
  %499 = vmatpush.msra.mxu0 %v284
  %500 = vmatpush.msra.mxu0 %v283
  %501 = vmatpush.msra.mxu0 %v282
  %502 = vmatpush.msra.mxu0 %v281
  %503 = vmatmul.f32.gmra.mxu0 %v483
  %v504 = vpop.f32.mrf.mxu0
  %v505 = vadd.f32 0.0, %v504
  %506 = vmatmul.f32.gmra.mxu0 %v484
  %v507 = vpop.f32.mrf.mxu0
  %v508 = vadd.f32 0.0, %v507
  %509 = vmatmul.f32.gmra.mxu0 %v485
  %v510 = vpop.f32.mrf.mxu0
  %v511 = vadd.f32 0.0, %v510
  %512 = vmatmul.f32.gmra.mxu0 %v486
  %v513 = vpop.f32.mrf.mxu0
  %v514 = vadd.f32 0.0, %v513
  %515 = vdwg.mxu0
  %v516 = vadd.f32 %v505, %v508
  %v517 = vadd.f32 %v516, %v511
  %v518 = vadd.f32 %v517, %v514
  %v519 = vrot.slane %v518, 4
  %v520 = vadd.f32 %v518, %v519
  %v521 = vrot.slane %v520, 2
  %v522 = vadd.f32 %v520, %v521
  %v523 = vrot.slane %v522, 1
  %v524 = vadd.f32 %v522, %v523
  %v525 = vmul.f32 %v524, 0.001953125
  %v526 = vmul.f32 %v482, %v482
  %v527 = vsub.f32 %v525, %v526
  %v528 = vsub.f32 %v433, %v482
  %v529 = vsub.f32 %v436, %v482
  %v530 = vsub.f32 %v439, %v482
  %v531 = vsub.f32 %v442, %v482
  %v532 = vadd.f32 %v527, 1e-05
  %v533 = vrsqrt.pop %v532
  %v534 = vmul.f32 %v533, %v532
  %v535 = vmul.f32 %v534, %v533
  %v536 = vmul.f32 0.5, %v535
  %v537 = vsub.f32 1.5, %v536
  %v538 = vmul.f32 %v533, %v537
  %vm539 = vweird.f32 %v532
  %vm540 = vweird.f32 %v533
  %vm541 = vmor %vm539, %vm540
  %v542 = vsel %vm541, %v533, %v538
  %v543 = vmul.f32 %v528, %v542
  %v544 = vmul.f32 %v529, %v542
  %v545 = vmul.f32 %v530, %v542
  %v546 = vmul.f32 %v531, %v542
  %v547 = vld [vmem:[%s2] sm:$0x1]
  %v549 = vperm.slane %v547, 0
  %v551 = vmul.f32 %v543, %v549
  %v552 = vmul.f32 %v544, %v549
  %v553 = vmul.f32 %v545, %v549
  %v554 = vmul.f32 %v546, %v549
  %v555 = vld [vmem:[%s3] sm:$0x1]
  %v557 = vperm.slane %v555, 0
  %v559 = vadd.f32 %v551, %v557
  %v560 = vadd.f32 %v552, %v557
  %v561 = vadd.f32 %v553, %v557
  %v562 = vadd.f32 %v554, %v557
  %v563 = vmax.f32 %v559, 0.0
  %v564 = vmax.f32 %v560, 0.0
  %v565 = vmax.f32 %v561, 0.0
  %v566 = vmax.f32 %v562, 0.0
  %567 = vst [vmem:[#allocation2] sm:$0x1] 0.0
  %568 = vst [vmem:[#allocation2 + $0x18] sm:$0x1] 0.0
  %569 = vst [vmem:[#allocation2 + $0x11] sm:$0x1] 0.0
  %570 = vst [vmem:[#allocation2 + $0x29] sm:$0x1] 0.0
  %571 = vst [vmem:[#allocation2 + $0x1] sm:$0xff] %v563
  %572 = vst [vmem:[#allocation2 + $0x9] sm:$0xff] %v564
  %573 = vst [vmem:[#allocation2 + $0x19] sm:$0xff] %v565
  %574 = vst [vmem:[#allocation2 + $0x21] sm:$0xff] %v566
  %v575 = vld [vmem:[#allocation2] sm:$0xff]
  %v576 = vld [vmem:[#allocation2 + $0x8] sm:$0xff]
  %v577 = vld [vmem:[#allocation2 + $0x18] sm:$0xff]
  %v578 = vld [vmem:[#allocation2 + $0x20] sm:$0xff]
  %v579 = vld [vmem:[#allocation2 + $0x1] sm:$0xff]
  %v580 = vld [vmem:[#allocation2 + $0x9] sm:$0xff]
  %v581 = vld [vmem:[#allocation2 + $0x19] sm:$0xff]
  %v582 = vld [vmem:[#allocation2 + $0x21] sm:$0xff]
  %v583 = vld [vmem:[#allocation2 + $0x2] sm:$0xff]
  %v584 = vld [vmem:[#allocation2 + $0xa] sm:$0xff]
  %v585 = vld [vmem:[#allocation2 + $0x1a] sm:$0xff]
  %v586 = vld [vmem:[#allocation2 + $0x22] sm:$0xff]
  %v587 = vld [vmem:[%s4] sm:$0xff]
  %v588 = vld [vmem:[%s4 + $0x8] sm:$0xff]
  %v589 = vld [vmem:[%s4 + $0x10] sm:$0xff]
  %v590 = vld [vmem:[%s4 + $0x18] sm:$0xff]
  %v591 = vld [vmem:[%s4 + $0x20] sm:$0xff]
  %v592 = vld [vmem:[%s4 + $0x28] sm:$0xff]
  %v593 = vld [vmem:[%s4 + $0x30] sm:$0xff]
  %v594 = vld [vmem:[%s4 + $0x38] sm:$0xff]
  %v595 = vld [vmem:[%s4 + $0x40] sm:$0xff]
  %v596 = vld [vmem:[%s4 + $0x48] sm:$0xff]
  %v597 = vld [vmem:[%s4 + $0x50] sm:$0xff]
  %v598 = vld [vmem:[%s4 + $0x58] sm:$0xff]
  %v599 = vld [vmem:[%s4 + $0x60] sm:$0xff]
  %v600 = vld [vmem:[%s4 + $0x68] sm:$0xff]
  %v601 = vld [vmem:[%s4 + $0x70] sm:$0xff]
  %v602 = vld [vmem:[%s4 + $0x78] sm:$0xff]
  %v603 = vld [vmem:[%s4 + $0x80] sm:$0xff]
  %v604 = vld [vmem:[%s4 + $0x88] sm:$0xff]
  %v605 = vld [vmem:[%s4 + $0x90] sm:$0xff]
  %v606 = vld [vmem:[%s4 + $0x98] sm:$0xff]
  %v607 = vld [vmem:[%s4 + $0xa0] sm:$0xff]
  %v608 = vld [vmem:[%s4 + $0xa8] sm:$0xff]
  %v609 = vld [vmem:[%s4 + $0xb0] sm:$0xff]
  %v610 = vld [vmem:[%s4 + $0xb8] sm:$0xff]
  %v611 = vld [vmem:[%s4 + $0xc0] sm:$0xff]
  %v612 = vld [vmem:[%s4 + $0xc8] sm:$0xff]
  %v613 = vld [vmem:[%s4 + $0xd0] sm:$0xff]
  %v614 = vld [vmem:[%s4 + $0xd8] sm:$0xff]
  %v615 = vld [vmem:[%s4 + $0xe0] sm:$0xff]
  %v616 = vld [vmem:[%s4 + $0xe8] sm:$0xff]
  %v617 = vld [vmem:[%s4 + $0xf0] sm:$0xff]
  %v618 = vld [vmem:[%s4 + $0xf8] sm:$0xff]
  %v619 = vld [vmem:[%s4 + $0x100] sm:$0xff]
  %v620 = vld [vmem:[%s4 + $0x108] sm:$0xff]
  %v621 = vld [vmem:[%s4 + $0x110] sm:$0xff]
  %v622 = vld [vmem:[%s4 + $0x118] sm:$0xff]
  %v623 = vld [vmem:[%s4 + $0x120] sm:$0xff]
  %v624 = vld [vmem:[%s4 + $0x128] sm:$0xff]
  %v625 = vld [vmem:[%s4 + $0x130] sm:$0xff]
  %v626 = vld [vmem:[%s4 + $0x138] sm:$0xff]
  %v627 = vld [vmem:[%s4 + $0x140] sm:$0xff]
  %v628 = vld [vmem:[%s4 + $0x148] sm:$0xff]
  %v629 = vld [vmem:[%s4 + $0x150] sm:$0xff]
  %v630 = vld [vmem:[%s4 + $0x158] sm:$0xff]
  %v631 = vld [vmem:[%s4 + $0x160] sm:$0xff]
  %v632 = vld [vmem:[%s4 + $0x168] sm:$0xff]
  %v633 = vld [vmem:[%s4 + $0x170] sm:$0xff]
  %v634 = vld [vmem:[%s4 + $0x178] sm:$0xff]
  %635 = vmatpush.msra.mxu0 %v602
  %636 = vmatpush.msra.mxu0 %v601
  %637 = vmatpush.msra.mxu0 %v600
  %638 = vmatpush.msra.mxu0 %v599
  %639 = vmatpush.msra.mxu0 %v598
  %640 = vmatpush.msra.mxu0 %v597
  %641 = vmatpush.msra.mxu0 %v596
  %642 = vmatpush.msra.mxu0 %v595
  %643 = vmatpush.msra.mxu0 %v594
  %644 = vmatpush.msra.mxu0 %v593
  %645 = vmatpush.msra.mxu0 %v592
  %646 = vmatpush.msra.mxu0 %v591
  %647 = vmatpush.msra.mxu0 %v590
  %648 = vmatpush.msra.mxu0 %v589
  %649 = vmatpush.msra.mxu0 %v588
  %650 = vmatpush.msra.mxu0 %v587
  %651 = vmatmul.f32.gmra.mxu0 %v575
  %v652 = vpop.f32.mrf.mxu0
  %v653 = vadd.f32 0.0, %v652
  %654 = vmatmul.f32.gmra.mxu0 %v576
  %v655 = vpop.f32.mrf.mxu0
  %v656 = vadd.f32 0.0, %v655
  %657 = vmatmul.f32.gmra.mxu0 %v577
  %v658 = vpop.f32.mrf.mxu0
  %v659 = vadd.f32 0.0, %v658
  %660 = vmatmul.f32.gmra.mxu0 %v578
  %v661 = vpop.f32.mrf.mxu0
  %v662 = vadd.f32 0.0, %v661
  %663 = vdwg.mxu0
  %664 = vmatpush.msra.mxu0 %v618
  %665 = vmatpush.msra.mxu0 %v617
  %666 = vmatpush.msra.mxu0 %v616
  %667 = vmatpush.msra.mxu0 %v615
  %668 = vmatpush.msra.mxu0 %v614
  %669 = vmatpush.msra.mxu0 %v613
  %670 = vmatpush.msra.mxu0 %v612
  %671 = vmatpush.msra.mxu0 %v611
  %672 = vmatpush.msra.mxu0 %v610
  %673 = vmatpush.msra.mxu0 %v609
  %674 = vmatpush.msra.mxu0 %v608
  %675 = vmatpush.msra.mxu0 %v607
  %676 = vmatpush.msra.mxu0 %v606
  %677 = vmatpush.msra.mxu0 %v605
  %678 = vmatpush.msra.mxu0 %v604
  %679 = vmatpush.msra.mxu0 %v603
  %680 = vmatmul.f32.gmra.mxu0 %v579
  %v681 = vpop.f32.mrf.mxu0
  %v682 = vadd.f32 %v653, %v681
  %683 = vmatmul.f32.gmra.mxu0 %v580
  %v684 = vpop.f32.mrf.mxu0
  %v685 = vadd.f32 %v656, %v684
  %686 = vmatmul.f32.gmra.mxu0 %v581
  %v687 = vpop.f32.mrf.mxu0
  %v688 = vadd.f32 %v659, %v687
  %689 = vmatmul.f32.gmra.mxu0 %v582
  %v690 = vpop.f32.mrf.mxu0
  %v691 = vadd.f32 %v662, %v690
  %692 = vdwg.mxu0
  %693 = vmatpush.msra.mxu0 %v634
  %694 = vmatpush.msra.mxu0 %v633
  %695 = vmatpush.msra.mxu0 %v632
  %696 = vmatpush.msra.mxu0 %v631
  %697 = vmatpush.msra.mxu0 %v630
  %698 = vmatpush.msra.mxu0 %v629
  %699 = vmatpush.msra.mxu0 %v628
  %700 = vmatpush.msra.mxu0 %v627
  %701 = vmatpush.msra.mxu0 %v626
  %702 = vmatpush.msra.mxu0 %v625
  %703 = vmatpush.msra.mxu0 %v624
  %704 = vmatpush.msra.mxu0 %v623
  %705 = vmatpush.msra.mxu0 %v622
  %706 = vmatpush.msra.mxu0 %v621
  %707 = vmatpush.msra.mxu0 %v620
  %708 = vmatpush.msra.mxu0 %v619
  %709 = vmatmul.f32.gmra.mxu0 %v583
  %v710 = vpop.f32.mrf.mxu0
  %v711 = vadd.f32 %v682, %v710
  %712 = vmatmul.f32.gmra.mxu0 %v584
  %v713 = vpop.f32.mrf.mxu0
  %v714 = vadd.f32 %v685, %v713
  %715 = vmatmul.f32.gmra.mxu0 %v585
  %v716 = vpop.f32.mrf.mxu0
  %v717 = vadd.f32 %v688, %v716
  %718 = vmatmul.f32.gmra.mxu0 %v586
  %v719 = vpop.f32.mrf.mxu0
  %v720 = vadd.f32 %v691, %v719
  %721 = vdwg.mxu0
  %722 = vmatpush.msra.mxu0 %v296
  %723 = vmatpush.msra.mxu0 %v295
  %724 = vmatpush.msra.mxu0 %v294
  %725 = vmatpush.msra.mxu0 %v293
  %726 = vmatpush.msra.mxu0 %v292
  %727 = vmatpush.msra.mxu0 %v291
  %728 = vmatpush.msra.mxu0 %v290
  %729 = vmatpush.msra.mxu0 %v289
  %730 = vmatpush.msra.mxu0 %v288
  %731 = vmatpush.msra.mxu0 %v287
  %732 = vmatpush.msra.mxu0 %v286
  %733 = vmatpush.msra.mxu0 %v285
  %734 = vmatpush.msra.mxu0 %v284
  %735 = vmatpush.msra.mxu0 %v283
  %736 = vmatpush.msra.mxu0 %v282
  %737 = vmatpush.msra.mxu0 %v281
  %738 = vmatmul.f32.gmra.mxu0 %v711
  %v739 = vpop.f32.mrf.mxu0
  %v740 = vadd.f32 0.0, %v739
  %741 = vmatmul.f32.gmra.mxu0 %v714
  %v742 = vpop.f32.mrf.mxu0
  %v743 = vadd.f32 0.0, %v742
  %744 = vmatmul.f32.gmra.mxu0 %v717
  %v745 = vpop.f32.mrf.mxu0
  %v746 = vadd.f32 0.0, %v745
  %747 = vmatmul.f32.gmra.mxu0 %v720
  %v748 = vpop.f32.mrf.mxu0
  %v749 = vadd.f32 0.0, %v748
  %750 = vdwg.mxu0
  %v751 = vadd.f32 %v740, %v743
  %v752 = vadd.f32 %v751, %v746
  %v753 = vadd.f32 %v752, %v749
  %v754 = vrot.slane %v753, 4
  %v755 = vadd.f32 %v753, %v754
  %v756 = vrot.slane %v755, 2
  %v757 = vadd.f32 %v755, %v756
  %v758 = vrot.slane %v757, 1
  %v759 = vadd.f32 %v757, %v758
  %v760 = vmul.f32 %v759, 0.001953125
  %v761 = vmul.f32 %v711, %v711
  %v762 = vmul.f32 %v714, %v714
  %v763 = vmul.f32 %v717, %v717
  %v764 = vmul.f32 %v720, %v720
  %765 = vmatpush.msra.mxu0 %v296
  %766 = vmatpush.msra.mxu0 %v295
  %767 = vmatpush.msra.mxu0 %v294
  %768 = vmatpush.msra.mxu0 %v293
  %769 = vmatpush.msra.mxu0 %v292
  %770 = vmatpush.msra.mxu0 %v291
  %771 = vmatpush.msra.mxu0 %v290
  %772 = vmatpush.msra.mxu0 %v289
  %773 = vmatpush.msra.mxu0 %v288
  %774 = vmatpush.msra.mxu0 %v287
  %775 = vmatpush.msra.mxu0 %v286
  %776 = vmatpush.msra.mxu0 %v285
  %777 = vmatpush.msra.mxu0 %v284
  %778 = vmatpush.msra.mxu0 %v283
  %779 = vmatpush.msra.mxu0 %v282
  %780 = vmatpush.msra.mxu0 %v281
  %781 = vmatmul.f32.gmra.mxu0 %v761
  %v782 = vpop.f32.mrf.mxu0
  %v783 = vadd.f32 0.0, %v782
  %784 = vmatmul.f32.gmra.mxu0 %v762
  %v785 = vpop.f32.mrf.mxu0
  %v786 = vadd.f32 0.0, %v785
  %787 = vmatmul.f32.gmra.mxu0 %v763
  %v788 = vpop.f32.mrf.mxu0
  %v789 = vadd.f32 0.0, %v788
  %790 = vmatmul.f32.gmra.mxu0 %v764
  %v791 = vpop.f32.mrf.mxu0
  %v792 = vadd.f32 0.0, %v791
  %793 = vdwg.mxu0
  %v794 = vadd.f32 %v783, %v786
  %v795 = vadd.f32 %v794, %v789
  %v796 = vadd.f32 %v795, %v792
  %v797 = vrot.slane %v796, 4
  %v798 = vadd.f32 %v796, %v797
  %v799 = vrot.slane %v798, 2
  %v800 = vadd.f32 %v798, %v799
  %v801 = vrot.slane %v800, 1
  %v802 = vadd.f32 %v800, %v801
  %v803 = vmul.f32 %v802, 0.001953125
  %v804 = vmul.f32 %v760, %v760
  %v805 = vsub.f32 %v803, %v804
  %v806 = vsub.f32 %v711, %v760
  %v807 = vsub.f32 %v714, %v760
  %v808 = vsub.f32 %v717, %v760
  %v809 = vsub.f32 %v720, %v760
  %v810 = vadd.f32 %v805, 1e-05
  %v811 = vrsqrt.pop %v810
  %v812 = vmul.f32 %v811, %v810
  %v813 = vmul.f32 %v812, %v811
  %v814 = vmul.f32 0.5, %v813
  %v815 = vsub.f32 1.5, %v814
  %v816 = vmul.f32 %v811, %v815
  %vm817 = vweird.f32 %v810
  %vm818 = vweird.f32 %v811
  %vm819 = vmor %vm817, %vm818
  %v820 = vsel %vm819, %v811, %v816
  %v821 = vmul.f32 %v806, %v820
  %v822 = vmul.f32 %v807, %v820
  %v823 = vmul.f32 %v808, %v820
  %v824 = vmul.f32 %v809, %v820
  %v825 = vld [vmem:[%s5] sm:$0x1]
  %v827 = vperm.slane %v825, 0
  %v829 = vmul.f32 %v821, %v827
  %v830 = vmul.f32 %v822, %v827
  %v831 = vmul.f32 %v823, %v827
  %v832 = vmul.f32 %v824, %v827
  %v833 = vld [vmem:[%s6] sm:$0x1]
  %v835 = vperm.slane %v833, 0
  %v837 = vadd.f32 %v829, %v835
  %v838 = vadd.f32 %v830, %v835
  %v839 = vadd.f32 %v831, %v835
  %v840 = vadd.f32 %v832, %v835
  %v841 = vld [vmem:[%s0 + $0x1] sm:$0xff]
  %v842 = vld [vmem:[%s0 + $0x9] sm:$0xff]
  %v843 = vld [vmem:[%s0 + $0x19] sm:$0xff]
  %v844 = vld [vmem:[%s0 + $0x21] sm:$0xff]
  %v845 = vadd.f32 %v837, %v841
  %v846 = vadd.f32 %v838, %v842
  %v847 = vadd.f32 %v839, %v843
  %v848 = vadd.f32 %v840, %v844
  %v849 = vmax.f32 %v845, 0.0
  %v850 = vmax.f32 %v846, 0.0
  %v851 = vmax.f32 %v847, 0.0
  %v852 = vmax.f32 %v848, 0.0
  %853 = vst [vmem:[%s7] sm:$0xff] %v849
  %854 = vst [vmem:[%s7 + $0x8] sm:$0xff] %v850
  %855 = vst [vmem:[%s7 + $0x10] sm:$0xff] %v851
  %856 = vst [vmem:[%s7 + $0x18] sm:$0xff] %v852
  // Predicated region
  $region30: #{residual_block_forward.1} parent=0 // pred_check
    _
  $region31: #{residual_block_forward.1} parent=0 // pred_check_branch
    %858 = sbr.rel (0) target = $region33
  $region32: #{residual_block_forward.1} parent=0 // pred_region
    _
  $region33: #{residual_block_forward.1} parent=0 // pred_fallthru
    _
  // Predicated region
  $region34: #{residual_block_forward.1} parent=0 // pred_check
    _
  $region35: #{residual_block_forward.1} parent=0 // pred_check_branch
    %860 = sbr.rel (0) target = $region37
  $region36: #{residual_block_forward.1} parent=0 // pred_region
    _
  $region37: #{residual_block_forward.1} parent=0 // pred_fallthru
    _

</llo_original>
